<compile_context>
chip_gen: v5e
topology: v5e:2x2
jax: 0.10.0
libtpu: 0.0.40
codegen_flags: <defaults>
</compile_context>

<pallas_src>
import functools

import numpy as np
import jax
import jax.numpy as jnp
from jax.experimental import pallas as pl
from jax.experimental.pallas import tpu as pltpu


def _round_up(v, m):
    return ((v + m - 1) // m) * m


# --------------------------------------------------------------------------
# Stage A: XW = D^{-1/2}_src * (X @ W_gcn)   (computed ONCE per node tile)
# --------------------------------------------------------------------------
def feature_transform_kernel(x_ref, dinv_ref, wg_ref, xw_ref):
    """x_ref: (TM, Fp), dinv_ref: (TM, 1) f32, wg_ref: (Fp, Fp), xw_ref: (TM, Fp)."""
    xw = jnp.dot(x_ref[...], wg_ref[...], preferred_element_type=jnp.float32)
    xw_ref[...] = (xw * dinv_ref[...]).astype(xw_ref.dtype)


# --------------------------------------------------------------------------
# Stage B: block-sparse aggregation  acc += A_hat[i, c] @ XW[c]  + fused heads
# --------------------------------------------------------------------------
def agg_heads_kernel(cols_ref, cnts_ref,                       # scalar prefetch (SMEM)
                     adj_ref, xw_ref, dinv_ref, bg_ref, wh_ref, bh_ref,
                     out_ref, acc_ref, *, tk):
    """Grid = (dest row tiles [parallel], non-zero adjacency col tiles [arbitrary]).

    cols_ref : (n_row_tiles*max_nnz,) i32  non-zero column-tile indices (padded, guarded)
    cnts_ref : (n_row_tiles,)         i32  #non-zero column tiles per row tile
    adj_ref  : (TM, TK)  bf16  A+I tile (pipelined via data-dependent index_map)
    xw_ref   : (Np, Fp)  resident D^{-1/2}_src-scaled X @ W_gcn
    dinv_ref : (TM, 1)   f32   dest-side D^{-1/2}
    bg_ref   : (1, Fp)   f32   GCN bias
    wh_ref   : (Fp, P)         fused [W_high || W_low]
    bh_ref   : (1, P)    f32   fused [b_high || b_low]
    out_ref  : (TM, P)   f32   lane-dense fused high||low logits
    acc_ref  : (TM, Fp)  f32   VMEM accumulator
    """
    i = pl.program_id(0)
    j = pl.program_id(1)
    max_nnz = pl.num_programs(1)

    @pl.when(j == 0)
    def _():
        acc_ref[...] = jnp.zeros_like(acc_ref)

    @pl.when(j < cnts_ref[i])
    def _():
        c = cols_ref[i * max_nnz + j]
        start = pl.multiple_of(c * tk, tk)
        xw_tile = xw_ref[pl.ds(start, tk), :]                       # resident VMEM slice
        acc_ref[...] += jnp.dot(adj_ref[...].astype(xw_tile.dtype), xw_tile,
                                preferred_element_type=jnp.float32)

    @pl.when(j == max_nnz - 1)
    def _():
        h = dinv_ref[...] * acc_ref[...] + bg_ref[...]               # f32 finalize
        heads = jnp.dot(h.astype(wh_ref.dtype), wh_ref[...],
                        preferred_element_type=jnp.float32) + bh_ref[...]
        out_ref[...] = heads.astype(out_ref.dtype)


def hierarchical_rl_dialogue_manager(x, edge_index, params, *,
                                     compute_dtype=jnp.float32, tm=128, tk=128):
    """x: [N, F_in] f32, edge_index: [2, E] int32 (row 0 = src, row 1 = dst)."""
    n, f_in = x.shape
    f_out = params["w_gcn"].shape[1]
    a = params["w_high"].shape[1]

    # ---- host glue: A_hat = A + I and D^{-1/2} (normalized NxN never materialized) ----
    src, dst = edge_index[0], edge_index[1]
    adj = jnp.zeros((n, n), jnp.float32).at[dst, src].add(1.0)
    adj = adj + jnp.eye(n, dtype=jnp.float32)
    deg = jnp.sum(adj, axis=1)
    dinv = jnp.where(deg > 0, jax.lax.rsqrt(deg), 0.0)

    # ---- MXU / vreg friendly padding (lane-dense 128-wide fused-head output slab) ----
    n_pad = _round_up(n, max(tm, tk))
    f_pad = _round_up(max(f_in, f_out), 128)
    p_pad = _round_up(2 * a, 128)
    n_row_tiles = n_pad // tm
    n_col_tiles = n_pad // tk

    # Adjacency in bf16: 0/1 (small-integer) entries are exact; halves the dominant HBM stream.
    adj_p = jnp.zeros((n_pad, n_pad), jnp.bfloat16).at[:n, :n].set(adj.astype(jnp.bfloat16))
    x_p = jnp.zeros((n_pad, f_pad), compute_dtype).at[:n, :f_in].set(x.astype(compute_dtype))
    dinv_p = jnp.zeros((n_pad, 1), jnp.float32).at[:n, 0].set(dinv)
    wg_p = jnp.zeros((f_pad, f_pad), compute_dtype).at[:f_in, :f_out].set(
        params["w_gcn"].astype(compute_dtype))
    bg_p = jnp.zeros((1, f_pad), jnp.float32).at[0, :f_out].set(params["b_gcn"])
    w_heads = jnp.concatenate([params["w_high"], params["w_low"]], axis=1)      # [F_out, 2A]
    b_heads = jnp.concatenate([params["b_high"], params["b_low"]], axis=0)      # [2A]
    wh_p = jnp.zeros((f_pad, p_pad), compute_dtype).at[:f_out, :2 * a].set(
        w_heads.astype(compute_dtype))
    bh_p = jnp.zeros((1, p_pad), jnp.float32).at[0, :2 * a].set(b_heads)

    # ---- block-sparsity structure of A+I (host/numpy, from edge_index + self loops) ----
    src_np = np.asarray(src, dtype=np.int64)
    dst_np = np.asarray(dst, dtype=np.int64)
    nodes_np = np.arange(n, dtype=np.int64)
    row_t = np.concatenate([dst_np // tm, nodes_np // tm])
    col_t = np.concatenate([src_np // tk, nodes_np // tk])
    nz = np.zeros((n_row_tiles, n_col_tiles), dtype=bool)
    nz[row_t, col_t] = True
    counts_np = nz.sum(axis=1).astype(np.int32)
    max_nnz = max(1, int(counts_np.max()))
    cols_np = np.zeros((n_row_tiles, max_nnz), dtype=np.int32)
    for i in range(n_row_tiles):
        idx = np.nonzero(nz[i])[0].astype(np.int32)
        if idx.size:
            cols_np[i, :idx.size] = idx
            cols_np[i, idx.size:] = idx[-1]          # repeated tiles are guarded off in-kernel
    cols = jnp.asarray(cols_np.reshape(-1))          # flat SMEM-friendly i32 [n_row_tiles*max_nnz]
    cnts = jnp.asarray(counts_np)                    # i32 [n_row_tiles]

    cw = jnp.dtype(compute_dtype).itemsize

    # ---------------- Stage A: XW = dinv_src * (X @ W_gcn) ----------------
    ft_flops = 2 * n_pad * f_pad * f_pad
    ft_bytes = 2 * n_pad * f_pad * cw + f_pad * f_pad * cw + n_pad * 4
    xw = pl.pallas_call(
        feature_transform_kernel,
        out_shape=jax.ShapeDtypeStruct((n_pad, f_pad), compute_dtype),
        grid_spec=pltpu.PrefetchScalarGridSpec(
            num_scalar_prefetch=0,
            grid=(n_row_tiles,),
            in_specs=[
                pl.BlockSpec((tm, f_pad), lambda i: (i, 0)),       # X tile
                pl.BlockSpec((tm, 1), lambda i: (i, 0)),           # D^{-1/2} (source side)
                pl.BlockSpec((f_pad, f_pad), lambda i: (0, 0)),    # W_gcn (grid-invariant)
            ],
            out_specs=pl.BlockSpec((tm, f_pad), lambda i: (i, 0)),
        ),
        compiler_params=pltpu.CompilerParams(dimension_semantics=("parallel",)),
        cost_estimate=pl.CostEstimate(flops=int(ft_flops), transcendentals=0,
                                      bytes_accessed=int(ft_bytes)),
    )(x_p, dinv_p, wg_p)

    # ---------------- Stage B: block-sparse aggregation + fused heads ----------------
    nnz_total = int(counts_np.sum())
    agg_flops = 2 * nnz_total * tm * tk * f_pad + 2 * n_pad * f_pad * p_pad
    agg_bytes = (nnz_total * tm * tk * 2                # bf16 adjacency, non-zero tiles only
                 + n_pad * f_pad * cw                   # resident XW, one pass
                 + n_pad * 4 + f_pad * 4 + p_pad * 4    # dinv + biases
                 + f_pad * p_pad * cw                   # fused head weights
                 + n_pad * p_pad * 4)                   # output

    grid = (n_row_tiles, max_nnz)
    kernel = functools.partial(agg_heads_kernel, tk=tk)
    out = pl.pallas_call(
        kernel,
        out_shape=jax.ShapeDtypeStruct((n_pad, p_pad), jnp.float32),
        grid_spec=pltpu.PrefetchScalarGridSpec(
            num_scalar_prefetch=2,                      # (cols, cnts) -> SMEM, used by index_maps
            grid=grid,
            in_specs=[
                # A+I: data-dependent column-tile index from prefetched sparsity structure.
                pl.BlockSpec((tm, tk),
                             lambda i, j, cols, cnts: (i, cols[i * max_nnz + j])),
                # Resident XW slab (constant index_map -> DMA'd once, sliced in-kernel).
                pl.BlockSpec((n_pad, f_pad), lambda i, j, cols, cnts: (0, 0)),
                pl.BlockSpec((tm, 1), lambda i, j, cols, cnts: (i, 0)),      # D^{-1/2} dest side
                pl.BlockSpec((1, f_pad), lambda i, j, cols, cnts: (0, 0)),   # b_gcn
                pl.BlockSpec((f_pad, p_pad), lambda i, j, cols, cnts: (0, 0)),  # W_high||W_low
                pl.BlockSpec((1, p_pad), lambda i, j, cols, cnts: (0, 0)),      # b_high||b_low
            ],
            out_specs=pl.BlockSpec((tm, p_pad), lambda i, j, cols, cnts: (i, 0)),
            scratch_shapes=[pltpu.VMEM((tm, f_pad), jnp.float32)],
        ),
        compiler_params=pltpu.CompilerParams(
            dimension_semantics=("parallel", "arbitrary"),   # row tiles split across v7x's 2 TCs
            vmem_limit_bytes=48 * 1024 * 1024,               # headroom vs v7x's 64 MiB VMEM
        ),
        cost_estimate=pl.CostEstimate(flops=int(agg_flops), transcendentals=0,
                                      bytes_accessed=int(agg_bytes)),
    )(cols, cnts, adj_p, xw, dinv_p, bg_p, wh_p, bh_p)

    high = out[:n, :a]
    low = out[:n, a:2 * a]
    return high, low


def init_params(key, f_in, f_out, num_actions):
    """Synthetic params with the PyTorch module's shapes (Linear weights pre-transposed)."""
    ks = jax.random.split(key, 6)
    sg = 1.0 / jnp.sqrt(jnp.float32(f_in))
    sl = 1.0 / jnp.sqrt(jnp.float32(f_out))
    return {
        "w_gcn": jax.random.uniform(ks[0], (f_in, f_out), jnp.float32, -sg, sg),
        "b_gcn": jax.random.uniform(ks[1], (f_out,), jnp.float32, -sg, sg),
        "w_high": jax.random.uniform(ks[2], (f_out, num_actions), jnp.float32, -sl, sl),
        "b_high": jax.random.uniform(ks[3], (num_actions,), jnp.float32, -sl, sl),
        "w_low": jax.random.uniform(ks[4], (f_out, num_actions), jnp.float32, -sl, sl),
        "b_low": jax.random.uniform(ks[5], (num_actions,), jnp.float32, -sl, sl),
    }


def reference_forward(x, edge_index, params):
    """Pure-JAX f32 reference (materializes a_norm; only used for the correctness check)."""
    n = x.shape[0]
    src, dst = edge_index[0], edge_index[1]
    adj = jnp.zeros((n, n), jnp.float32).at[dst, src].add(1.0) + jnp.eye(n, dtype=jnp.float32)
    deg = jnp.sum(adj, axis=1)
    dinv = jax.lax.rsqrt(deg)
    a_norm = dinv[:, None] * adj * dinv[None, :]
    h = a_norm @ (x @ params["w_gcn"]) + params["b_gcn"][None, :]
    high = h @ params["w_high"] + params["b_high"][None, :]
    low = h @ params["w_low"] + params["b_low"][None, :]
    return high, low


if __name__ == "__main__":
    key = jax.random.PRNGKey(0)
    k_x, k_p = jax.random.split(key)

    # Batch 32 small dialogue ring-graphs block-diagonally (torch_geometric-style batching):
    # 256 nodes -> 2 parallel 128-row tiles (keeps both v7x TCs busy), and the adjacency is
    # tile-block-diagonal so the sparsity skip reduces the reduction axis to a single step.
    NODES_PER_GRAPH = 8
    NUM_GRAPHS = 32
    F_IN = 32          # GCN in_channels / Linear in_features ("num_nodes" ctor arg)
    F_OUT = 32         # GCN out_channels ("num_edges" ctor arg; == F_IN for shape consistency)
    NUM_ACTIONS = 16
    N = NODES_PER_GRAPH * NUM_GRAPHS                 # 256 nodes

    x = jax.random.normal(k_x, (N, F_IN), dtype=jnp.float32)
    base = jnp.arange(NODES_PER_GRAPH, dtype=jnp.int32)
    src = jnp.concatenate([base + g * NODES_PER_GRAPH for g in range(NUM_GRAPHS)])
    dst = jnp.concatenate([jnp.roll(base, -1) + g * NODES_PER_GRAPH for g in range(NUM_GRAPHS)])
    edge_index = jnp.stack([src, dst], axis=0)       # [2, 256]

    params = init_params(k_p, F_IN, F_OUT, NUM_ACTIONS)
    ref_high, ref_low = reference_forward(x, edge_index, params)

    # 1) Strict f32 path (exact module semantics; bf16 adjacency is exact for 0/1 entries).
    high, low = hierarchical_rl_dialogue_manager(x, edge_index, params,
                                                 compute_dtype=jnp.float32)
    jax.block_until_ready((high, low))
    assert high.shape == (N, NUM_ACTIONS) and low.shape == (N, NUM_ACTIONS)
    assert jnp.allclose(high, ref_high, atol=1e-4, rtol=1e-4)
    assert jnp.allclose(low, ref_low, atol=1e-4, rtol=1e-4)

    # 2) bf16-operand / f32-accumulate path (MXU-native on v6e/v7x; halves HBM/VMEM bytes).
    high_bf, low_bf = hierarchical_rl_dialogue_manager(x, edge_index, params,
                                                       compute_dtype=jnp.bfloat16)
    jax.block_until_ready((high_bf, low_bf))
    assert jnp.allclose(high_bf, ref_high, atol=5e-2, rtol=5e-2)
    assert jnp.allclose(low_bf, ref_low, atol=5e-2, rtol=5e-2)

    print("KERNEL_OK")
</pallas_src>

<mosaic_0001>
module attributes {stable_mosaic.version = 11 : i64} {
  func.func @feature_transform_kernel(%arg0: i32, %arg1: memref<128x128xf32, #tpu.memory_space<vmem>>, %arg2: memref<128x1xf32, #tpu.memory_space<vmem>>, %arg3: memref<128x128xf32, #tpu.memory_space<vmem>>, %arg4: memref<128x128xf32, #tpu.memory_space<vmem>>) attributes {dimension_semantics = [#tpu.dimension_semantics<parallel>], iteration_bounds = array<i64: 2>, scalar_prefetch = 0 : i64, scratch_operands = 0 : i64, tpu.core_type = #tpu.core_type<tc>, window_params = [{transform_indices = @transform_0, window_bounds = array<i64: 128, 128>}, {transform_indices = @transform_1, window_bounds = array<i64: 128, 1>}, {pipeline_mode = #tpu.pipeline_mode<synchronous>, transform_indices = @transform_2, window_bounds = array<i64: 128, 128>}, {transform_indices = @transform_3, window_bounds = array<i64: 128, 128>}]} {
    %c0 = arith.constant 0 : index
    %c0_0 = arith.constant 0 : index
    %0 = vector.load %arg1[%c0, %c0_0] : memref<128x128xf32, #tpu.memory_space<vmem>>, vector<128x128xf32>
    %c0_1 = arith.constant 0 : index
    %c0_2 = arith.constant 0 : index
    %1 = vector.load %arg3[%c0_1, %c0_2] : memref<128x128xf32, #tpu.memory_space<vmem>>, vector<128x128xf32>
    %cst = arith.constant dense<0.000000e+00> : vector<128x128xf32>
    %2 = tpu.matmul %0, %1, %cst {dimension_numbers = #tpu.dot_dimension_numbers<[1], [0], [0], [1], [0, 0, 1, 1], [], []>} : vector<128x128xf32>, vector<128x128xf32>, vector<128x128xf32> -> vector<128x128xf32>
    %c0_3 = arith.constant 0 : index
    %c0_4 = arith.constant 0 : index
    %3 = vector.load %arg2[%c0_3, %c0_4] : memref<128x1xf32, #tpu.memory_space<vmem>>, vector<128x1xf32>
    %4 = vector.broadcast %3 : vector<128x1xf32> to vector<128x128xf32>
    %5 = arith.mulf %2, %4 : vector<128x128xf32>
    %c0_5 = arith.constant 0 : index
    %c0_6 = arith.constant 0 : index
    %6 = vector.load %arg4[%c0_5, %c0_6] : memref<128x128xf32, #tpu.memory_space<vmem>>, vector<128x128xf32>
    tpu.vector_store %arg4[%c0_5, %c0_6], %5 {strides = array<i32>} : memref<128x128xf32, #tpu.memory_space<vmem>>, vector<128x128xf32>,
    return
  }
  func.func @transform_0(%arg0: i32) -> (i32, i32) {
    %c0_i32 = arith.constant 0 : i32
    %c0_i32_0 = arith.constant 0 : i32
    return %arg0, %c0_i32 : i32, i32
  }
  func.func @transform_1(%arg0: i32) -> (i32, i32) {
    %c0_i32 = arith.constant 0 : i32
    %c0_i32_0 = arith.constant 0 : i32
    return %arg0, %c0_i32 : i32, i32
  }
  func.func @transform_2(%arg0: i32) -> (i32, i32) {
    %c0_i32 = arith.constant 0 : i32
    %c0_i32_0 = arith.constant 0 : i32
    %c0_i32_1 = arith.constant 0 : i32
    return %c0_i32, %c0_i32_0 : i32, i32
  }
  func.func @transform_3(%arg0: i32) -> (i32, i32) {
    %c0_i32 = arith.constant 0 : i32
    %c0_i32_0 = arith.constant 0 : i32
    return %arg0, %c0_i32 : i32, i32
  }
}

</mosaic_0001>

<llo_original>
// kernel: tpu_custom_call.1
$region0: #{tpu_custom_call.1}
  #allocation0 [shape = 'u32[]', space=smem, size = 0x4, offset = 0x4, fixed_abs, tag = 'smem constant byte address 0x4 - core index']
  #allocation1 [shape = 'u32[72,128]{1,0:T(1,128)}', space=vmem, size = 0x9000, scoped, tag = 'internal scratch']
  %s0 = inlined_call_operand.vmem [shape: f32[256,128], index: 0, kind: input, shape index: {}]
  %s1 = inlined_call_operand.vmem [shape: f32[256,1], index: 1, kind: input, shape index: {}]
  %s2 = inlined_call_operand.hbm [shape: f32[128,128], index: 2, kind: input, shape index: {}]
  %s3 = inlined_call_operand.hbm [shape: f32[256,128], index: 3, kind: output, shape index: {}]
  %s4 = sld [smem:[#allocation0]]
  $region49: #{tpu_custom_call.1} parent=0
    _
  %s6 = ssub.s32 1, %s4
  %s7 = scalar_select 0, %s6, %s4
  $region1: #{tpu_custom_call.1} parent=0
    #allocation2 [shape = 'u8[65536]{0}', space=vmem, size = 0x10000, scoped, tag = 'input window, operand 2, single buffered']
    #allocation3 [shape = 's32[2]{0}', space=sflag, size = 0x8, scoped, tag = 'scoped memory for tpu_custom_call.1']
    #allocation4 [shape = 's32[2]{0}', space=sflag, size = 0x8, scoped, tag = 'scoped memory for tpu_custom_call.1']
    #allocation5 [shape = 'u8[131072]{0}', space=vmem, size = 0x20000, scoped, tag = 'output window, operand 0']
    %8 = vsyncpa [#allocation3], 0
    %9 = vsyncpa [#allocation4], 0
    %s10 = scalar_lea.sflag [#allocation4], 1
    %11 = vsyncpa %s10, 0
    loop: start=0, step=1, limit=4
    $region2: #{tpu_custom_call.1} parent=1 // loop_pre_header
      _
    $region3: #{tpu_custom_call.1} parent=1 // loop_header
      %s13 = sphi 0, %s17
      %p14 = scmp.ge.s32.totalorder %s13, 4
      %s23 = sphi 0, %s25
      %s26 = sphi 0, %s23
      %s27 = sphi 0, %s26
      %s43 = sphi 0, %s27
      %s49 = sphi 0, %s51
      %s52 = sphi 0, %s49
      %s53 = sphi 0, %s52
      %s69 = sphi 0, %s53
      %s73 = sphi 0, %s73
      %s75 = sphi 0, %s73
      %s76 = sphi 0, %s75
      %s90 = sphi 0, %s76
      %s96 = sphi 0, %s98
      %s99 = sphi 0, %s96
      %s100 = sphi 0, %s99
      %s116 = sphi 0, %s100
    $region4: #{tpu_custom_call.1} parent=1 // loop_header_branch
      %16 = sbr.rel (%p14) target = $region8
    $region5: #{tpu_custom_call.1} parent=1 // loop_body
      %s18 = ssub.s32 %s13, 1
      %s19 = ssub.s32 %s13, 2
      %s20 = sadd.s32 %s13, 1
      %s21 = ssub.s32 %s13, %s20
      %p22 = scmp.eq.s32.totalorder %s21, 0
      %s24 = sadd.s32 %s23, 1
      %s25 = scalar_select %p22, %s23, %s24
      %p28 = pneg %p22
      %p29 = scmp.eq.s32.totalorder %s13, 1
      %p30 = por %p28, %p29
      %p31 = scmp.ne.s32.totalorder %s23, %s26
      %p32 = scmp.eq.s32.totalorder %s13, 0
      %p33 = por %p31, %p32
      %p34 = scmp.ne.s32.totalorder %s23, %s26
      %p35 = scmp.eq.s32.totalorder %s18, 1
      %p36 = por %p34, %p35
      %p37 = scmp.ne.s32.totalorder %s26, %s27
      %p38 = scmp.eq.s32.totalorder %s18, 0
      %p39 = por %p37, %p38
      %p40 = scmp.ne.s32.totalorder %s26, %s27
      %p41 = scmp.eq.s32.totalorder %s19, 1
      %p42 = por %p40, %p41
      %p44 = scmp.ne.s32.totalorder %s27, %s43
      %p45 = scmp.eq.s32.totalorder %s19, 0
      %p46 = por %p44, %p45
      %s47 = ssub.s32 %s13, %s20
      %p48 = scmp.eq.s32.totalorder %s47, 0
      %s50 = sadd.s32 %s49, 1
      %s51 = scalar_select %p48, %s49, %s50
      %p54 = pneg %p48
      %p55 = scmp.eq.s32.totalorder %s13, 1
      %p56 = por %p54, %p55
      %p57 = scmp.ne.s32.totalorder %s49, %s52
      %p58 = scmp.eq.s32.totalorder %s13, 0
      %p59 = por %p57, %p58
      %p60 = scmp.ne.s32.totalorder %s49, %s52
      %p61 = scmp.eq.s32.totalorder %s18, 1
      %p62 = por %p60, %p61
      %p63 = scmp.ne.s32.totalorder %s52, %s53
      %p64 = scmp.eq.s32.totalorder %s18, 0
      %p65 = por %p63, %p64
      %p66 = scmp.ne.s32.totalorder %s52, %s53
      %p67 = scmp.eq.s32.totalorder %s19, 1
      %p68 = por %p66, %p67
      %p70 = scmp.ne.s32.totalorder %s53, %s69
      %p71 = scmp.eq.s32.totalorder %s19, 0
      %p72 = por %p70, %p71
      %s74 = sadd.s32 %s73, 1
      %p77 = scmp.eq.s32.totalorder %s13, 1
      %p78 = scmp.ne.s32.totalorder %s73, %s75
      %p79 = scmp.eq.s32.totalorder %s13, 0
      %p80 = por %p78, %p79
      %p81 = scmp.ne.s32.totalorder %s73, %s75
      %p82 = scmp.eq.s32.totalorder %s18, 1
      %p83 = por %p81, %p82
      %p84 = scmp.ne.s32.totalorder %s75, %s76
      %p85 = scmp.eq.s32.totalorder %s18, 0
      %p86 = por %p84, %p85
      %p87 = scmp.ne.s32.totalorder %s75, %s76
      %p88 = scmp.eq.s32.totalorder %s19, 1
      %p89 = por %p87, %p88
      %p91 = scmp.ne.s32.totalorder %s76, %s90
      %p92 = scmp.eq.s32.totalorder %s19, 0
      %p93 = por %p91, %p92
      %s94 = ssub.s32 %s13, %s20
      %p95 = scmp.eq.s32.totalorder %s94, 0
      %s97 = sadd.s32 %s96, 1
      %s98 = scalar_select %p95, %s96, %s97
      %p101 = pneg %p95
      %p102 = scmp.eq.s32.totalorder %s13, 1
      %p103 = por %p101, %p102
      %p104 = scmp.ne.s32.totalorder %s96, %s99
      %p105 = scmp.eq.s32.totalorder %s13, 0
      %p106 = por %p104, %p105
      %p107 = scmp.ne.s32.totalorder %s96, %s99
      %p108 = scmp.eq.s32.totalorder %s18, 1
      %p109 = por %p107, %p108
      %p110 = scmp.ne.s32.totalorder %s99, %s100
      %p111 = scmp.eq.s32.totalorder %s18, 0
      %p112 = por %p110, %p111
      %p113 = scmp.ne.s32.totalorder %s99, %s100
      %p114 = scmp.eq.s32.totalorder %s19, 1
      %p115 = por %p113, %p114
      %p117 = scmp.ne.s32.totalorder %s100, %s116
      %p118 = scmp.eq.s32.totalorder %s19, 0
      %p119 = por %p117, %p118
      %p120 = scmp.le.s32.totalorder 1, %s13
      %p121 = scmp.lt.s32.totalorder %s13, 3
      %p122 = pnand %p120, %p121
      %p123 = pneg %p122
      // Predicated region
      $region9: #{tpu_custom_call.1} parent=5 // pred_check
        _
      $region10: #{tpu_custom_call.1} parent=5 // pred_check_branch
        %125 = sbr.rel (%p122) target = $region12
      $region11: #{tpu_custom_call.1} parent=5 // pred_region
        %s126 = ssub.s32 %s13, 1
        // Predicated region
        $region13: #{tpu_custom_call.1} parent=11 // pred_check
          %p127 = pneg %p86
        $region14: #{tpu_custom_call.1} parent=11 // pred_check_branch
          %129 = sbr.rel (%p127) target = $region16
        $region15: #{tpu_custom_call.1} parent=11 // pred_region
          %131 = vsyncadd [#allocation3], 0
          %s132 = sshll.u32 %s2, 4
          %s133 = int_to_ptr.hbm [resolvable:$true] %s132
          %s134 = sshll.u32 [#allocation2], 4
          %s135 = int_to_ptr.vmem [resolvable:$true] %s134
          %140 = dma.hbm_to_vmem [thread:$0]  %s133, 2048, %s135, [#allocation3], 128, 128, 8
        $region16: #{tpu_custom_call.1} parent=11 // pred_fallthru
          _
      $region12: #{tpu_custom_call.1} parent=5 // pred_fallthru
        _
      %p141 = scmp.lt.s32.totalorder %s13, 2
      // Predicated region
      $region17: #{tpu_custom_call.1} parent=5 // pred_check
        %p142 = pneg %p141
      $region18: #{tpu_custom_call.1} parent=5 // pred_check_branch
        %144 = sbr.rel (%p142) target = $region20
      $region19: #{tpu_custom_call.1} parent=5 // pred_region
        // Predicated region
        $region21: #{tpu_custom_call.1} parent=19 // pred_check
          %p145 = pneg %p33
        $region22: #{tpu_custom_call.1} parent=19 // pred_check_branch
          %147 = sbr.rel (%p145) target = $region24
        $region23: #{tpu_custom_call.1} parent=19 // pred_region
          %s148 = smul.u32 16, %s13
          %p149 = scmp.lt.s32.totalorder %s148, 31
          %s150 = scalar_select %p149, %s148, 31
          %s151 = smul.addr %s150, 8
          %s152 = scalar_lea.vmem %s0, %s151
          %s153 = smul.u32 16, %s13
        $region24: #{tpu_custom_call.1} parent=19 // pred_fallthru
          _
        // Predicated region
        $region25: #{tpu_custom_call.1} parent=19 // pred_check
          %p154 = pneg %p59
        $region26: #{tpu_custom_call.1} parent=19 // pred_check_branch
          %156 = sbr.rel (%p154) target = $region28
        $region27: #{tpu_custom_call.1} parent=19 // pred_region
          %s157 = smul.u32 16, %s13
          %p158 = scmp.lt.s32.totalorder %s157, 31
          %s159 = scalar_select %p158, %s157, 31
          %s160 = smul.addr %s159, 8
          %s161 = scalar_lea.vmem %s1, %s160
          %s162 = smul.u32 16, %s13
        $region28: #{tpu_custom_call.1} parent=19 // pred_fallthru
          _
      $region20: #{tpu_custom_call.1} parent=5 // pred_fallthru
        _
      %p163 = scmp.le.s32.totalorder 1, %s13
      %p164 = scmp.lt.s32.totalorder %s13, 3
      %p165 = pnand %p163, %p164
      %p166 = pneg %p165
      // Predicated region
      $region29: #{tpu_custom_call.1} parent=5 // pred_check
        _
      $region30: #{tpu_custom_call.1} parent=5 // pred_check_branch
        %168 = sbr.rel (%p165) target = $region32
      $region31: #{tpu_custom_call.1} parent=5 // pred_region
        %s169 = ssub.s32 %s13, 1
        // Predicated region
        $region33: #{tpu_custom_call.1} parent=31 // pred_check
          %p170 = pneg %p86
        $region34: #{tpu_custom_call.1} parent=31 // pred_check_branch
          %172 = sbr.rel (%p170) target = $region36
        $region35: #{tpu_custom_call.1} parent=31 // pred_region
          %174 = dma.done [#allocation3], 2048
        $region36: #{tpu_custom_call.1} parent=31 // pred_fallthru
          _
        %s175 = smul.u32 16, %s18
        %p176 = scmp.lt.s32.totalorder %s175, 31
        %s177 = scalar_select %p176, %s175, 31
        %s178 = smul.addr %s177, 8
        %s179 = scalar_lea.vmem %s0, %s178
        %p180 = pneg %p39
        %p181 = pneg %p36
        %s182 = smul.u32 16, %s18
        %p183 = scmp.lt.s32.totalorder %s182, 31
        %s184 = scalar_select %p183, %s182, 31
        %s185 = smul.addr %s184, 8
        %s186 = scalar_lea.vmem %s1, %s185
        %p187 = pneg %p65
        %p188 = pneg %p62
        %p189 = pneg %p86
        %p190 = pneg %p83
        %p191 = pneg %p112
        %p192 = pneg %p109
        %s193 = sand.u32 %s99, 1
        %s194 = scalar_lea.sflag [#allocation4], %s193
        %s195 = sand.u32 %s99, 1
        %s196 = smul.addr %s195, 128
        %s197 = scalar_lea.vmem [#allocation5], %s196
        %s198 = smul.u32 16, %s18
        %p199 = scmp.lt.s32.totalorder %s198, 31
        %s200 = scalar_select %p199, %s198, 31
        %s201 = smul.addr %s200, 8
        %s202 = scalar_lea.vmem %s0, %s201
        %s203 = smul.u32 16, %s18
        %s204 = smul.u32 16, %s18
        %p205 = scmp.lt.s32.totalorder %s204, 31
        %s206 = scalar_select %p205, %s204, 31
        %s207 = smul.addr %s206, 8
        %s208 = scalar_lea.vmem %s1, %s207
        %s209 = smul.u32 16, %s18
        %s210 = smul.u32 16, %s18
        %v211 = vld [vmem:[%s202] sm:$0xff]
        %v212 = vld [vmem:[%s202 + $0x8] sm:$0xff]
        %v213 = vld [vmem:[%s202 + $0x10] sm:$0xff]
        %v214 = vld [vmem:[%s202 + $0x18] sm:$0xff]
        %v215 = vld [vmem:[%s202 + $0x20] sm:$0xff]
        %v216 = vld [vmem:[%s202 + $0x28] sm:$0xff]
        %v217 = vld [vmem:[%s202 + $0x30] sm:$0xff]
        %v218 = vld [vmem:[%s202 + $0x38] sm:$0xff]
        %v219 = vld [vmem:[%s202 + $0x40] sm:$0xff]
        %v220 = vld [vmem:[%s202 + $0x48] sm:$0xff]
        %v221 = vld [vmem:[%s202 + $0x50] sm:$0xff]
        %v222 = vld [vmem:[%s202 + $0x58] sm:$0xff]
        %v223 = vld [vmem:[%s202 + $0x60] sm:$0xff]
        %v224 = vld [vmem:[%s202 + $0x68] sm:$0xff]
        %v225 = vld [vmem:[%s202 + $0x70] sm:$0xff]
        %v226 = vld [vmem:[%s202 + $0x78] sm:$0xff]
        %v227 = vld [vmem:[#allocation2] sm:$0xff]
        %v228 = vld [vmem:[#allocation2 + $0x8] sm:$0xff]
        %v229 = vld [vmem:[#allocation2 + $0x10] sm:$0xff]
        %v230 = vld [vmem:[#allocation2 + $0x18] sm:$0xff]
        %v231 = vld [vmem:[#allocation2 + $0x20] sm:$0xff]
        %v232 = vld [vmem:[#allocation2 + $0x28] sm:$0xff]
        %v233 = vld [vmem:[#allocation2 + $0x30] sm:$0xff]
        %v234 = vld [vmem:[#allocation2 + $0x38] sm:$0xff]
        %v235 = vld [vmem:[#allocation2 + $0x40] sm:$0xff]
        %v236 = vld [vmem:[#allocation2 + $0x48] sm:$0xff]
        %v237 = vld [vmem:[#allocation2 + $0x50] sm:$0xff]
        %v238 = vld [vmem:[#allocation2 + $0x58] sm:$0xff]
        %v239 = vld [vmem:[#allocation2 + $0x60] sm:$0xff]
        %v240 = vld [vmem:[#allocation2 + $0x68] sm:$0xff]
        %v241 = vld [vmem:[#allocation2 + $0x70] sm:$0xff]
        %v242 = vld [vmem:[#allocation2 + $0x78] sm:$0xff]
        %243 = vmatpush.msra.mxu0 %v242
        %244 = vmatpush.msra.mxu0 %v241
        %245 = vmatpush.msra.mxu0 %v240
        %246 = vmatpush.msra.mxu0 %v239
        %247 = vmatpush.msra.mxu0 %v238
        %248 = vmatpush.msra.mxu0 %v237
        %249 = vmatpush.msra.mxu0 %v236
        %250 = vmatpush.msra.mxu0 %v235
        %251 = vmatpush.msra.mxu0 %v234
        %252 = vmatpush.msra.mxu0 %v233
        %253 = vmatpush.msra.mxu0 %v232
        %254 = vmatpush.msra.mxu0 %v231
        %255 = vmatpush.msra.mxu0 %v230
        %256 = vmatpush.msra.mxu0 %v229
        %257 = vmatpush.msra.mxu0 %v228
        %258 = vmatpush.msra.mxu0 %v227
        %259 = vmatmul.f32.gmra.mxu0 %v211
        %v260 = vpop.f32.mrf.mxu0
        %v261 = vadd.f32 0.0, %v260
        %262 = vmatmul.f32.gmra.mxu0 %v212
        %v263 = vpop.f32.mrf.mxu0
        %v264 = vadd.f32 0.0, %v263
        %265 = vmatmul.f32.gmra.mxu0 %v213
        %v266 = vpop.f32.mrf.mxu0
        %v267 = vadd.f32 0.0, %v266
        %268 = vmatmul.f32.gmra.mxu0 %v214
        %v269 = vpop.f32.mrf.mxu0
        %v270 = vadd.f32 0.0, %v269
        %271 = vmatmul.f32.gmra.mxu0 %v215
        %v272 = vpop.f32.mrf.mxu0
        %v273 = vadd.f32 0.0, %v272
        %274 = vmatmul.f32.gmra.mxu0 %v216
        %v275 = vpop.f32.mrf.mxu0
        %v276 = vadd.f32 0.0, %v275
        %277 = vmatmul.f32.gmra.mxu0 %v217
        %v278 = vpop.f32.mrf.mxu0
        %v279 = vadd.f32 0.0, %v278
        %280 = vmatmul.f32.gmra.mxu0 %v218
        %v281 = vpop.f32.mrf.mxu0
        %v282 = vadd.f32 0.0, %v281
        %283 = vmatmul.f32.gmra.mxu0 %v219
        %v284 = vpop.f32.mrf.mxu0
        %v285 = vadd.f32 0.0, %v284
        %286 = vmatmul.f32.gmra.mxu0 %v220
        %v287 = vpop.f32.mrf.mxu0
        %v288 = vadd.f32 0.0, %v287
        %289 = vmatmul.f32.gmra.mxu0 %v221
        %v290 = vpop.f32.mrf.mxu0
        %v291 = vadd.f32 0.0, %v290
        %292 = vmatmul.f32.gmra.mxu0 %v222
        %v293 = vpop.f32.mrf.mxu0
        %v294 = vadd.f32 0.0, %v293
        %295 = vmatmul.f32.gmra.mxu0 %v223
        %v296 = vpop.f32.mrf.mxu0
        %v297 = vadd.f32 0.0, %v296
        %298 = vmatmul.f32.gmra.mxu0 %v224
        %v299 = vpop.f32.mrf.mxu0
        %v300 = vadd.f32 0.0, %v299
        %301 = vmatmul.f32.gmra.mxu0 %v225
        %v302 = vpop.f32.mrf.mxu0
        %v303 = vadd.f32 0.0, %v302
        %304 = vmatmul.f32.gmra.mxu0 %v226
        %v305 = vpop.f32.mrf.mxu0
        %v306 = vadd.f32 0.0, %v305
        %307 = vdwg.mxu0
        %v308 = vld [vmem:[%s208] sm:$0xff]
        %v309 = vld [vmem:[%s208 + $0x8] sm:$0xff]
        %v310 = vld [vmem:[%s208 + $0x10] sm:$0xff]
        %v311 = vld [vmem:[%s208 + $0x18] sm:$0xff]
        %v312 = vld [vmem:[%s208 + $0x20] sm:$0xff]
        %v313 = vld [vmem:[%s208 + $0x28] sm:$0xff]
        %v314 = vld [vmem:[%s208 + $0x30] sm:$0xff]
        %v315 = vld [vmem:[%s208 + $0x38] sm:$0xff]
        %v316 = vld [vmem:[%s208 + $0x40] sm:$0xff]
        %v317 = vld [vmem:[%s208 + $0x48] sm:$0xff]
        %v318 = vld [vmem:[%s208 + $0x50] sm:$0xff]
        %v319 = vld [vmem:[%s208 + $0x58] sm:$0xff]
        %v320 = vld [vmem:[%s208 + $0x60] sm:$0xff]
        %v321 = vld [vmem:[%s208 + $0x68] sm:$0xff]
        %v322 = vld [vmem:[%s208 + $0x70] sm:$0xff]
        %v323 = vld [vmem:[%s208 + $0x78] sm:$0xff]
        %325 = vset.pattern.permute.xlu0 0
        %326 = vperm.xlu0 %325, %v308
        %v327 = vpop.permute.xlu0 %326
        %330 = vset.pattern.permute.xlu0 0
        %331 = vperm.xlu0 %330, %v309
        %v332 = vpop.permute.xlu0 %331
        %335 = vset.pattern.permute.xlu0 0
        %336 = vperm.xlu0 %335, %v310
        %v337 = vpop.permute.xlu0 %336
        %340 = vset.pattern.permute.xlu0 0
        %341 = vperm.xlu0 %340, %v311
        %v342 = vpop.permute.xlu0 %341
        %345 = vset.pattern.permute.xlu0 0
        %346 = vperm.xlu0 %345, %v312
        %v347 = vpop.permute.xlu0 %346
        %350 = vset.pattern.permute.xlu0 0
        %351 = vperm.xlu0 %350, %v313
        %v352 = vpop.permute.xlu0 %351
        %355 = vset.pattern.permute.xlu0 0
        %356 = vperm.xlu0 %355, %v314
        %v357 = vpop.permute.xlu0 %356
        %360 = vset.pattern.permute.xlu0 0
        %361 = vperm.xlu0 %360, %v315
        %v362 = vpop.permute.xlu0 %361
        %365 = vset.pattern.permute.xlu0 0
        %366 = vperm.xlu0 %365, %v316
        %v367 = vpop.permute.xlu0 %366
        %370 = vset.pattern.permute.xlu0 0
        %371 = vperm.xlu0 %370, %v317
        %v372 = vpop.permute.xlu0 %371
        %375 = vset.pattern.permute.xlu0 0
        %376 = vperm.xlu0 %375, %v318
        %v377 = vpop.permute.xlu0 %376
        %380 = vset.pattern.permute.xlu0 0
        %381 = vperm.xlu0 %380, %v319
        %v382 = vpop.permute.xlu0 %381
        %385 = vset.pattern.permute.xlu0 0
        %386 = vperm.xlu0 %385, %v320
        %v387 = vpop.permute.xlu0 %386
        %390 = vset.pattern.permute.xlu0 0
        %391 = vperm.xlu0 %390, %v321
        %v392 = vpop.permute.xlu0 %391
        %395 = vset.pattern.permute.xlu0 0
        %396 = vperm.xlu0 %395, %v322
        %v397 = vpop.permute.xlu0 %396
        %400 = vset.pattern.permute.xlu0 0
        %401 = vperm.xlu0 %400, %v323
        %v402 = vpop.permute.xlu0 %401
        %v404 = vmul.f32 %v261, %v327
        %v405 = vmul.f32 %v264, %v332
        %v406 = vmul.f32 %v267, %v337
        %v407 = vmul.f32 %v270, %v342
        %v408 = vmul.f32 %v273, %v347
        %v409 = vmul.f32 %v276, %v352
        %v410 = vmul.f32 %v279, %v357
        %v411 = vmul.f32 %v282, %v362
        %v412 = vmul.f32 %v285, %v367
        %v413 = vmul.f32 %v288, %v372
        %v414 = vmul.f32 %v291, %v377
        %v415 = vmul.f32 %v294, %v382
        %v416 = vmul.f32 %v297, %v387
        %v417 = vmul.f32 %v300, %v392
        %v418 = vmul.f32 %v303, %v397
        %v419 = vmul.f32 %v306, %v402
        %420 = vst [vmem:[%s197] sm:$0xff] %v404
        %421 = vst [vmem:[%s197 + $0x8] sm:$0xff] %v405
        %422 = vst [vmem:[%s197 + $0x10] sm:$0xff] %v406
        %423 = vst [vmem:[%s197 + $0x18] sm:$0xff] %v407
        %424 = vst [vmem:[%s197 + $0x20] sm:$0xff] %v408
        %425 = vst [vmem:[%s197 + $0x28] sm:$0xff] %v409
        %426 = vst [vmem:[%s197 + $0x30] sm:$0xff] %v410
        %427 = vst [vmem:[%s197 + $0x38] sm:$0xff] %v411
        %428 = vst [vmem:[%s197 + $0x40] sm:$0xff] %v412
        %429 = vst [vmem:[%s197 + $0x48] sm:$0xff] %v413
        %430 = vst [vmem:[%s197 + $0x50] sm:$0xff] %v414
        %431 = vst [vmem:[%s197 + $0x58] sm:$0xff] %v415
        %432 = vst [vmem:[%s197 + $0x60] sm:$0xff] %v416
        %433 = vst [vmem:[%s197 + $0x68] sm:$0xff] %v417
        %434 = vst [vmem:[%s197 + $0x70] sm:$0xff] %v418
        %435 = vst [vmem:[%s197 + $0x78] sm:$0xff] %v419
        %s436 = sand.u32 %s99, 1
        %s437 = scalar_lea.sflag [#allocation4], %s436
        %s438 = sand.u32 %s99, 1
        %s439 = smul.addr %s438, 128
        %s440 = scalar_lea.vmem [#allocation5], %s439
        // Predicated region
        $region37: #{tpu_custom_call.1} parent=31 // pred_check
          %p441 = pneg %p109
        $region38: #{tpu_custom_call.1} parent=31 // pred_check_branch
          %443 = sbr.rel (%p441) target = $region40
        $region39: #{tpu_custom_call.1} parent=31 // pred_region
          %s444 = smul.u32 16, %s18
          %446 = vsyncadd %s437, 0
          %s447 = smul.addr %s444, 8
          %s448 = scalar_lea.hbm %s3, %s447
          %s449 = sshll.u32 %s440, 4
          %s450 = int_to_ptr.vmem [resolvable:$true] %s449
          %s451 = sshll.u32 %s448, 4
          %s452 = int_to_ptr.hbm [resolvable:$true] %s451
          %457 = dma.vmem_to_hbm [thread:$0]  %s450, 2048, %s452, %s437, 128, 128, 8
        $region40: #{tpu_custom_call.1} parent=31 // pred_fallthru
          _
      $region32: #{tpu_custom_call.1} parent=5 // pred_fallthru
        _
      %p458 = scmp.le.s32.totalorder 2, %s13
      // Predicated region
      $region41: #{tpu_custom_call.1} parent=5 // pred_check
        %p459 = pneg %p458
      $region42: #{tpu_custom_call.1} parent=5 // pred_check_branch
        %461 = sbr.rel (%p459) target = $region44
      $region43: #{tpu_custom_call.1} parent=5 // pred_region
        %s462 = ssub.s32 %s13, 2
        // Predicated region
        $region45: #{tpu_custom_call.1} parent=43 // pred_check
          %p463 = pneg %p115
        $region46: #{tpu_custom_call.1} parent=43 // pred_check_branch
          %465 = sbr.rel (%p463) target = $region48
        $region47: #{tpu_custom_call.1} parent=43 // pred_region
          %s466 = sand.u32 %s100, 1
          %s467 = scalar_lea.sflag [#allocation4], %s466
          %s468 = sand.u32 %s100, 1
          %s469 = smul.addr %s468, 128
          %s470 = scalar_lea.vmem [#allocation5], %s469
          %472 = dma.done %s467, 2048
        $region48: #{tpu_custom_call.1} parent=43 // pred_fallthru
          _
      $region44: #{tpu_custom_call.1} parent=5 // pred_fallthru
        _
    $region6: #{tpu_custom_call.1} parent=1 // loop_footer
      %s17 = sadd.s32 1, %s13
    $region7: #{tpu_custom_call.1} parent=1 // loop_footer_branch
      %12 = sbr.rel target = $region3
    $region8: #{tpu_custom_call.1} parent=1 // loop_exit
      _
    %473 = vsyncpa [#allocation3], 1
    %s474 = scalar_lea.sflag [#allocation3], 1
    %475 = vsyncpa %s474, 1
    %476 = vsyncpa [#allocation4], 1
    %s477 = scalar_lea.sflag [#allocation4], 1
    %478 = vsyncpa %s477, 1

</llo_original>
